<compile_context>
chip_gen: v6e
topology: v6e:2x2x1
jax: 0.10.0
libtpu: 0.0.40
codegen_flags: <defaults>
</compile_context>

<pallas_src>
import functools
import math

import jax
import jax.numpy as jnp
from jax.experimental import pallas as pl
from jax.experimental.pallas import tpu as pltpu


# ---------------------------------------------------------------------------
# Kernels
# ---------------------------------------------------------------------------

def _grouped_logits_kernel(x_ref, w_ref, b_ref, logits_ref):
    """Lane-dense forward tile.

    x_ref      : (TG, G*F)   native dtype, G feature rows packed per MXU row
    w_ref      : (G*F, G*C)  bf16 block-diagonal weight (VMEM resident)
    b_ref      : (1,  G*C)   f32 bias tiled G times (VMEM resident)
    logits_ref : (TG, G*C)   bf16 lane-dense logits
    """
    x = x_ref[...].astype(jnp.bfloat16)            # in-kernel cast: free (VPU slack)
    acc = jnp.dot(x, w_ref[...], preferred_element_type=jnp.float32)
    logits_ref[...] = (acc + b_ref[...]).astype(logits_ref.dtype)


def _logits_preds_kernel(x_ref, w_ref, b_ref, logits_ref, preds_ref):
    """Metrics tile: logits + fused argmax (process_batch path).

    x_ref      : (TM, F)  native dtype
    w_ref      : (F, C)   bf16 weight (VMEM resident)
    b_ref      : (1, C)   f32 bias (VMEM resident)
    logits_ref : (TM, C)  bf16 logits
    preds_ref  : (TM, 1)  int32 argmax over classes
    """
    x = x_ref[...].astype(jnp.bfloat16)
    logits = jnp.dot(x, w_ref[...], preferred_element_type=jnp.float32) + b_ref[...]
    logits_store = logits.astype(logits_ref.dtype)
    logits_ref[...] = logits_store

    # Fused argmax (first-occurrence tie-break) computed from the *emitted*
    # (bf16-rounded) values so preds == jnp.argmax(returned logits) exactly.
    la = logits_store.astype(jnp.float32)
    c = la.shape[-1]
    max_val = jnp.max(la, axis=-1, keepdims=True)
    col = jax.lax.broadcasted_iota(jnp.int32, la.shape, 1)
    cand = jnp.where(la == max_val, col, jnp.int32(c))
    preds_ref[...] = jnp.min(cand, axis=-1, keepdims=True).astype(jnp.int32)


# ---------------------------------------------------------------------------
# Tiling helpers
# ---------------------------------------------------------------------------

def _round_up(n, m):
    return ((n + m - 1) // m) * m


def _group_factor(num_classes):
    """Smallest G such that G * num_classes is a multiple of 128 (lane-dense)."""
    return 128 // math.gcd(128, num_classes)


def _choose_row_tile(n_rows, target):
    """Pick a row-tile size.

    Multiple of 8 (or the full row count for tiny inputs), <= target, and
    preferring an even number of grid steps >= 2: keeps both v7x TensorCores
    busy ("parallel" axis) and gives the double-buffered pipeline something to
    overlap.  v5e/v6e (single TC) only pay ~0.35us extra per step.
    """
    if n_rows <= 8:
        return n_rows
    t = max(8, (min(target, n_rows) // 8) * 8)
    steps = -(-n_rows // t)
    if steps % 2 == 1:
        steps += 1
        t = max(8, _round_up(-(-n_rows // steps), 8))
    return t


def _vmem_limit(tile_bytes):
    # Headroom above the double-buffered footprint, capped for v7x (64 MiB VMEM).
    return int(min(max(8 << 20, 2 * tile_bytes), 40 << 20))


# ---------------------------------------------------------------------------
# Forward (inference) path: lane-dense grouped logits-only kernel
# ---------------------------------------------------------------------------

@functools.partial(jax.jit, static_argnames=("tile_m",))
def _forward_logits(x, w, b, tile_m=32768):
    """(B, S, F) -> (B, S, C) bf16 logits via lane-dense grouped matmul."""
    B, S, F = x.shape
    C = w.shape[1]
    M = B * S
    G = _group_factor(C)              # G*C multiple of 128 -> unmasked 128-lane stores
    GF, GC = G * F, G * C

    x2d = x.reshape(M, F)
    Mp = _round_up(M, G)
    if Mp != M:
        # Only copies when B*S % G != 0; typical medaka batches satisfy this.
        x2d = jnp.pad(x2d, ((0, Mp - M), (0, 0)))
    xg = x2d.reshape(Mp // G, GF)     # free, row-major regrouping

    # Block-diagonal weight (G*F, G*C): block g == w.  Tiny & VMEM-resident
    # (128 KiB bf16 for F=32, C=8, G=16).
    eye = jnp.eye(G, dtype=jnp.float32)
    w_bd = jnp.einsum("gh,fc->gfhc", eye, w.astype(jnp.float32))
    w_bd = w_bd.reshape(GF, GC).astype(jnp.bfloat16)
    b_t = jnp.tile(b.reshape(1, C).astype(jnp.float32), (1, G))   # (1, G*C)

    Mg = Mp // G
    tg = _choose_row_tile(Mg, max(1, tile_m // G))
    grid = (pl.cdiv(Mg, tg),)

    in_row = GF * x.dtype.itemsize
    out_row = GC * 2
    resident = GF * GC * 2 + GC * 4
    tile_bytes = 2 * tg * (in_row + out_row) + resident

    cost = pl.CostEstimate(
        flops=2 * Mg * GF * GC,
        transcendentals=0,
        bytes_accessed=Mg * (in_row + out_row) + resident,
    )

    logits_g = pl.pallas_call(
        _grouped_logits_kernel,
        out_shape=jax.ShapeDtypeStruct((Mg, GC), jnp.bfloat16),
        grid=grid,
        in_specs=[
            pl.BlockSpec((tg, GF), lambda i: (i, 0)),   # streamed packed row tiles
            pl.BlockSpec((GF, GC), lambda i: (0, 0)),   # resident block-diag weight
            pl.BlockSpec((1, GC), lambda i: (0, 0)),    # resident tiled bias
        ],
        out_specs=pl.BlockSpec((tg, GC), lambda i: (i, 0)),
        compiler_params=pltpu.CompilerParams(
            dimension_semantics=("parallel",),          # 2-TC shard on v7x
            vmem_limit_bytes=_vmem_limit(tile_bytes),
        ),
        cost_estimate=cost,
    )(xg, w_bd, b_t)

    return logits_g.reshape(Mp, C)[:M].reshape(B, S, C)


# ---------------------------------------------------------------------------
# Metrics (training) path: fused logits + argmax kernel
# ---------------------------------------------------------------------------

@functools.partial(jax.jit, static_argnames=("tile_m",))
def _forward_logits_preds(x, w, b, tile_m=32768):
    """(B, S, F) -> ((B, S, C) bf16 logits, (B, S) int32 argmax preds)."""
    B, S, F = x.shape
    C = w.shape[1]
    M = B * S

    x2d = x.reshape(M, F)
    w_bf = w.astype(jnp.bfloat16)
    b2d = b.reshape(1, C).astype(jnp.float32)

    tm = _choose_row_tile(M, tile_m)
    grid = (pl.cdiv(M, tm),)

    in_row = F * x.dtype.itemsize
    out_row = C * 2 + 4
    resident = F * C * 2 + C * 4
    tile_bytes = 2 * tm * (in_row + out_row) + resident

    cost = pl.CostEstimate(
        flops=2 * M * F * C,
        transcendentals=0,
        bytes_accessed=M * (in_row + out_row) + resident,
    )

    logits2d, preds2d = pl.pallas_call(
        _logits_preds_kernel,
        out_shape=(
            jax.ShapeDtypeStruct((M, C), jnp.bfloat16),
            jax.ShapeDtypeStruct((M, 1), jnp.int32),
        ),
        grid=grid,
        in_specs=[
            pl.BlockSpec((tm, F), lambda i: (i, 0)),
            pl.BlockSpec((F, C), lambda i: (0, 0)),
            pl.BlockSpec((1, C), lambda i: (0, 0)),
        ],
        out_specs=(
            pl.BlockSpec((tm, C), lambda i: (i, 0)),
            pl.BlockSpec((tm, 1), lambda i: (i, 0)),
        ),
        compiler_params=pltpu.CompilerParams(
            dimension_semantics=("parallel",),
            vmem_limit_bytes=_vmem_limit(tile_bytes),
        ),
        cost_estimate=cost,
    )(x2d, w_bf, b2d)

    logits = logits2d.reshape(B, S, C)
    preds = preds2d[:, 0].reshape(B, S)
    return logits, preds


# ---------------------------------------------------------------------------
# TorchModel-equivalent API
# ---------------------------------------------------------------------------

def torch_model_forward(x, w, b, *, tile_m=32768):
    """Forward pass: (B, S, F) -> (B, S, C) bf16 logits (lane-dense kernel)."""
    return _forward_logits(x, w, b, tile_m=tile_m)


def predict_on_batch(x, w, b):
    """Mirror of TorchModel.predict_on_batch: forward only, returns logits."""
    return torch_model_forward(x, w, b)


def process_batch_metrics(x, w, b, labels):
    """Mirror of TorchModel.process_batch metric computation.

    Argmax predictions come straight out of the fused kernel (no logits
    round-trip through HBM just to compute predictions).
    TODO(synk): loss_fn and majority_vote_probs handling are caller-side and
    not part of the kernel.
    """
    logits, preds = _forward_logits_preds(x, w, b)
    metrics = {
        "n_model_correct": jnp.sum(preds == labels),
        "n_positions": labels.size,
    }
    return logits, metrics


# ---------------------------------------------------------------------------
# Demo / self-test
# ---------------------------------------------------------------------------

if __name__ == "__main__":
    key = jax.random.PRNGKey(0)
    kx, kw, kb, kl = jax.random.split(key, 4)

    B, S, F, C = 2, 8, 32, 8   # batch, positions, features, num_classes

    x = jax.random.normal(kx, (B, S, F), dtype=jnp.float32)
    w = jax.random.normal(kw, (F, C), dtype=jnp.float32) * 0.1
    bias = jax.random.normal(kb, (C,), dtype=jnp.float32) * 0.01
    labels = jax.random.randint(kl, (B, S), 0, C)

    # Forward / inference path (lane-dense grouped kernel, bf16 logits).
    logits = jax.block_until_ready(torch_model_forward(x, w, bias))
    assert logits.shape == (B, S, C)
    assert logits.dtype == jnp.bfloat16

    # Metrics path (fused argmax kernel).
    m_logits, metrics = process_batch_metrics(x, w, bias, labels)
    m_logits = jax.block_until_ready(m_logits)
    assert m_logits.shape == (B, S, C)

    # Loose sanity vs full-f32 reference (bf16 input/output rounding only).
    ref = x.reshape(B * S, F) @ w + bias
    assert jnp.allclose(logits.reshape(B * S, C).astype(jnp.float32), ref,
                        atol=1e-1, rtol=5e-2), "forward kernel mismatch"
    assert jnp.allclose(m_logits.reshape(B * S, C).astype(jnp.float32), ref,
                        atol=1e-1, rtol=5e-2), "metrics kernel mismatch"

    # Fused argmax must agree exactly with argmax of the kernel's own logits.
    _, preds = _forward_logits_preds(x, w, bias)
    ref_preds = jnp.argmax(m_logits, axis=-1).astype(preds.dtype)
    assert jnp.array_equal(preds, ref_preds), "fused argmax mismatch"

    assert int(metrics["n_positions"]) == B * S
    assert 0 <= int(metrics["n_model_correct"]) <= B * S

    print("KERNEL_OK")
</pallas_src>

<mosaic_0001>
module attributes {stable_mosaic.version = 11 : i64} {
  func.func @_grouped_logits_kernel(%arg0: i32, %arg1: memref<1x512xf32, #tpu.memory_space<vmem>>, %arg2: memref<512x128xbf16, #tpu.memory_space<vmem>>, %arg3: memref<1x128xf32, #tpu.memory_space<vmem>>, %arg4: memref<1x128xbf16, #tpu.memory_space<vmem>>) attributes {dimension_semantics = [#tpu.dimension_semantics<parallel>], iteration_bounds = array<i64: 1>, scalar_prefetch = 0 : i64, scratch_operands = 0 : i64, tpu.core_type = #tpu.core_type<tc>, window_params = [{transform_indices = @transform_0, window_bounds = array<i64: 1, 512>}, {pipeline_mode = #tpu.pipeline_mode<synchronous>, transform_indices = @transform_1, window_bounds = array<i64: 512, 128>}, {pipeline_mode = #tpu.pipeline_mode<synchronous>, transform_indices = @transform_2, window_bounds = array<i64: 1, 128>}, {transform_indices = @transform_3, window_bounds = array<i64: 1, 128>}]} {
    %c0 = arith.constant 0 : index
    %c0_0 = arith.constant 0 : index
    %0 = vector.load %arg1[%c0, %c0_0] : memref<1x512xf32, #tpu.memory_space<vmem>>, vector<1x512xf32>
    %1 = arith.truncf %0 : vector<1x512xf32> to vector<1x512xbf16>
    %c0_1 = arith.constant 0 : index
    %c0_2 = arith.constant 0 : index
    %2 = vector.load %arg2[%c0_1, %c0_2] : memref<512x128xbf16, #tpu.memory_space<vmem>>, vector<512x128xbf16>
    %cst = arith.constant dense<0.000000e+00> : vector<1x128xf32>
    %3 = tpu.matmul %1, %2, %cst {dimension_numbers = #tpu.dot_dimension_numbers<[1], [0], [0], [1], [0, 0, 1, 1], [], []>} : vector<1x512xbf16>, vector<512x128xbf16>, vector<1x128xf32> -> vector<1x128xf32>
    %c0_3 = arith.constant 0 : index
    %c0_4 = arith.constant 0 : index
    %4 = vector.load %arg3[%c0_3, %c0_4] : memref<1x128xf32, #tpu.memory_space<vmem>>, vector<1x128xf32>
    %5 = arith.addf %3, %4 : vector<1x128xf32>
    %6 = arith.truncf %5 : vector<1x128xf32> to vector<1x128xbf16>
    %c0_5 = arith.constant 0 : index
    %c0_6 = arith.constant 0 : index
    %7 = vector.load %arg4[%c0_5, %c0_6] : memref<1x128xbf16, #tpu.memory_space<vmem>>, vector<1x128xbf16>
    tpu.vector_store %arg4[%c0_5, %c0_6], %6 {strides = array<i32>} : memref<1x128xbf16, #tpu.memory_space<vmem>>, vector<1x128xbf16>,
    return
  }
  func.func @transform_0(%arg0: i32) -> (i32, i32) {
    %c0_i32 = arith.constant 0 : i32
    %c0_i32_0 = arith.constant 0 : i32
    return %arg0, %c0_i32 : i32, i32
  }
  func.func @transform_1(%arg0: i32) -> (i32, i32) {
    %c0_i32 = arith.constant 0 : i32
    %c0_i32_0 = arith.constant 0 : i32
    %c0_i32_1 = arith.constant 0 : i32
    return %c0_i32, %c0_i32_0 : i32, i32
  }
  func.func @transform_2(%arg0: i32) -> (i32, i32) {
    %c0_i32 = arith.constant 0 : i32
    %c0_i32_0 = arith.constant 0 : i32
    %c0_i32_1 = arith.constant 0 : i32
    return %c0_i32, %c0_i32_0 : i32, i32
  }
  func.func @transform_3(%arg0: i32) -> (i32, i32) {
    %c0_i32 = arith.constant 0 : i32
    %c0_i32_0 = arith.constant 0 : i32
    return %arg0, %c0_i32 : i32, i32
  }
}

</mosaic_0001>

<llo_original>
// kernel: _forward_logits.1
$region0: #{_forward_logits.1}
  #allocation0 [shape = 'u32[]', space=smem, size = 0x4, offset = 0x4, fixed_abs, tag = 'smem constant byte address 0x4 - core index']
  #allocation1 [shape = 'u32[144,128]{1,0:T(1,128)}', space=vmem, size = 0x12000, scoped, tag = 'internal scratch']
  %s0 = inlined_call_operand.vmem [shape: f32[1,512], index: 0, kind: input, shape index: {}]
  %s1 = inlined_call_operand.vmem [shape: bf16[512,128], index: 1, kind: input, shape index: {}]
  %s2 = inlined_call_operand.vmem [shape: f32[1,128], index: 2, kind: input, shape index: {}]
  %s3 = inlined_call_operand.vmem [shape: bf16[1,128], index: 3, kind: output, shape index: {}]
  %s4 = sld [smem:[#allocation0]]
  $region22: #{_forward_logits.1} parent=0
    _
  %s6 = ssub.s32 1, %s4
  %s7 = scalar_select 0, %s6, %s4
  // Predicated region
  $region2: #{_forward_logits.1} parent=0 // pred_check
    _
  $region3: #{_forward_logits.1} parent=0 // pred_check_branch
    %9 = sbr.rel (0) target = $region5
  $region4: #{_forward_logits.1} parent=0 // pred_region
    _
  $region5: #{_forward_logits.1} parent=0 // pred_fallthru
    _
  // Predicated region
  $region6: #{_forward_logits.1} parent=0 // pred_check
    _
  $region7: #{_forward_logits.1} parent=0 // pred_check_branch
    %11 = sbr.rel (0) target = $region9
  $region8: #{_forward_logits.1} parent=0 // pred_region
    _
  $region9: #{_forward_logits.1} parent=0 // pred_fallthru
    _
  // Predicated region
  $region10: #{_forward_logits.1} parent=0 // pred_check
    _
  $region11: #{_forward_logits.1} parent=0 // pred_check_branch
    %13 = sbr.rel (0) target = $region13
  $region12: #{_forward_logits.1} parent=0 // pred_region
    _
  $region13: #{_forward_logits.1} parent=0 // pred_fallthru
    _
  %v15 = vld [vmem:[%s0] sm:$0xf]
  %v17 = vlaneseq
  %v18 = vshrl.u32 %v17, 7
  %v19 = vsub.s32 0, %v18
  %v20 = vrot.slane %v15, %v19
  %v21 = vlaneseq
  %v22 = vshrl.u32 %v21, 7
  %v23 = vsub.s32 1, %v22
  %v24 = vrot.slane %v15, %v23
  %v25 = vlaneseq
  %v26 = vshrl.u32 %v25, 7
  %v27 = vsub.s32 2, %v26
  %v28 = vrot.slane %v15, %v27
  %v29 = vlaneseq
  %v30 = vshrl.u32 %v29, 7
  %v31 = vsub.s32 3, %v30
  %v32 = vrot.slane %v15, %v31
  %v37 = vpack.c.bf16 %v20, %v20
  %v38 = vpack.c.bf16 %v24, %v24
  %v39 = vpack.c.bf16 %v28, %v28
  %v40 = vpack.c.bf16 %v32, %v32
  %v41 = vld [vmem:[%s1] sm:$0xf]
  %v42 = vld [vmem:[%s1 + $0x4] sm:$0xf]
  %v43 = vld [vmem:[%s1 + $0x8] sm:$0xf]
  %v44 = vld [vmem:[%s1 + $0xc] sm:$0xf]
  %v45 = vld [vmem:[%s1 + $0x10] sm:$0xf]
  %v46 = vld [vmem:[%s1 + $0x14] sm:$0xf]
  %v47 = vld [vmem:[%s1 + $0x18] sm:$0xf]
  %v48 = vld [vmem:[%s1 + $0x1c] sm:$0xf]
  %v49 = vld [vmem:[%s1 + $0x20] sm:$0xf]
  %v50 = vld [vmem:[%s1 + $0x24] sm:$0xf]
  %v51 = vld [vmem:[%s1 + $0x28] sm:$0xf]
  %v52 = vld [vmem:[%s1 + $0x2c] sm:$0xf]
  %v53 = vld [vmem:[%s1 + $0x30] sm:$0xf]
  %v54 = vld [vmem:[%s1 + $0x34] sm:$0xf]
  %v55 = vld [vmem:[%s1 + $0x38] sm:$0xf]
  %v56 = vld [vmem:[%s1 + $0x3c] sm:$0xf]
  %v57 = vld [vmem:[%s1 + $0x40] sm:$0xf]
  %v58 = vld [vmem:[%s1 + $0x44] sm:$0xf]
  %v59 = vld [vmem:[%s1 + $0x48] sm:$0xf]
  %v60 = vld [vmem:[%s1 + $0x4c] sm:$0xf]
  %v61 = vld [vmem:[%s1 + $0x50] sm:$0xf]
  %v62 = vld [vmem:[%s1 + $0x54] sm:$0xf]
  %v63 = vld [vmem:[%s1 + $0x58] sm:$0xf]
  %v64 = vld [vmem:[%s1 + $0x5c] sm:$0xf]
  %v65 = vld [vmem:[%s1 + $0x60] sm:$0xf]
  %v66 = vld [vmem:[%s1 + $0x64] sm:$0xf]
  %v67 = vld [vmem:[%s1 + $0x68] sm:$0xf]
  %v68 = vld [vmem:[%s1 + $0x6c] sm:$0xf]
  %v69 = vld [vmem:[%s1 + $0x70] sm:$0xf]
  %v70 = vld [vmem:[%s1 + $0x74] sm:$0xf]
  %v71 = vld [vmem:[%s1 + $0x78] sm:$0xf]
  %v72 = vld [vmem:[%s1 + $0x7c] sm:$0xf]
  %v73 = vld [vmem:[%s1 + $0x80] sm:$0xf]
  %v74 = vld [vmem:[%s1 + $0x84] sm:$0xf]
  %v75 = vld [vmem:[%s1 + $0x88] sm:$0xf]
  %v76 = vld [vmem:[%s1 + $0x8c] sm:$0xf]
  %v77 = vld [vmem:[%s1 + $0x90] sm:$0xf]
  %v78 = vld [vmem:[%s1 + $0x94] sm:$0xf]
  %v79 = vld [vmem:[%s1 + $0x98] sm:$0xf]
  %v80 = vld [vmem:[%s1 + $0x9c] sm:$0xf]
  %v81 = vld [vmem:[%s1 + $0xa0] sm:$0xf]
  %v82 = vld [vmem:[%s1 + $0xa4] sm:$0xf]
  %v83 = vld [vmem:[%s1 + $0xa8] sm:$0xf]
  %v84 = vld [vmem:[%s1 + $0xac] sm:$0xf]
  %v85 = vld [vmem:[%s1 + $0xb0] sm:$0xf]
  %v86 = vld [vmem:[%s1 + $0xb4] sm:$0xf]
  %v87 = vld [vmem:[%s1 + $0xb8] sm:$0xf]
  %v88 = vld [vmem:[%s1 + $0xbc] sm:$0xf]
  %v89 = vld [vmem:[%s1 + $0xc0] sm:$0xf]
  %v90 = vld [vmem:[%s1 + $0xc4] sm:$0xf]
  %v91 = vld [vmem:[%s1 + $0xc8] sm:$0xf]
  %v92 = vld [vmem:[%s1 + $0xcc] sm:$0xf]
  %v93 = vld [vmem:[%s1 + $0xd0] sm:$0xf]
  %v94 = vld [vmem:[%s1 + $0xd4] sm:$0xf]
  %v95 = vld [vmem:[%s1 + $0xd8] sm:$0xf]
  %v96 = vld [vmem:[%s1 + $0xdc] sm:$0xf]
  %v97 = vld [vmem:[%s1 + $0xe0] sm:$0xf]
  %v98 = vld [vmem:[%s1 + $0xe4] sm:$0xf]
  %v99 = vld [vmem:[%s1 + $0xe8] sm:$0xf]
  %v100 = vld [vmem:[%s1 + $0xec] sm:$0xf]
  %v101 = vld [vmem:[%s1 + $0xf0] sm:$0xf]
  %v102 = vld [vmem:[%s1 + $0xf4] sm:$0xf]
  %v103 = vld [vmem:[%s1 + $0xf8] sm:$0xf]
  %v104 = vld [vmem:[%s1 + $0xfc] sm:$0xf]
  %v105 = vld [vmem:[%s2] sm:$0x1]
  %v170 = vunpack.c.l.b16 %v41
  %v171 = vunpack.c.l.b16 %v42
  %v172 = vunpack.c.l.b16 %v43
  %v173 = vunpack.c.l.b16 %v44
  %v174 = vunpack.c.l.b16 %v45
  %v175 = vunpack.c.l.b16 %v46
  %v176 = vunpack.c.l.b16 %v47
  %v177 = vunpack.c.l.b16 %v48
  %v178 = vunpack.c.l.b16 %v49
  %v179 = vunpack.c.l.b16 %v50
  %v180 = vunpack.c.l.b16 %v51
  %v181 = vunpack.c.l.b16 %v52
  %v182 = vunpack.c.l.b16 %v53
  %v183 = vunpack.c.l.b16 %v54
  %v184 = vunpack.c.l.b16 %v55
  %v185 = vunpack.c.l.b16 %v56
  %v186 = vunpack.c.l.b16 %v57
  %v187 = vunpack.c.l.b16 %v58
  %v188 = vunpack.c.l.b16 %v59
  %v189 = vunpack.c.l.b16 %v60
  %v190 = vunpack.c.l.b16 %v61
  %v191 = vunpack.c.l.b16 %v62
  %v192 = vunpack.c.l.b16 %v63
  %v193 = vunpack.c.l.b16 %v64
  %v194 = vunpack.c.l.b16 %v65
  %v195 = vunpack.c.l.b16 %v66
  %v196 = vunpack.c.l.b16 %v67
  %v197 = vunpack.c.l.b16 %v68
  %v198 = vunpack.c.l.b16 %v69
  %v199 = vunpack.c.l.b16 %v70
  %v200 = vunpack.c.l.b16 %v71
  %v201 = vunpack.c.l.b16 %v72
  %v202 = vunpack.c.l.b16 %v73
  %v203 = vunpack.c.l.b16 %v74
  %v204 = vunpack.c.l.b16 %v75
  %v205 = vunpack.c.l.b16 %v76
  %v206 = vunpack.c.l.b16 %v77
  %v207 = vunpack.c.l.b16 %v78
  %v208 = vunpack.c.l.b16 %v79
  %v209 = vunpack.c.l.b16 %v80
  %v210 = vunpack.c.l.b16 %v81
  %v211 = vunpack.c.l.b16 %v82
  %v212 = vunpack.c.l.b16 %v83
  %v213 = vunpack.c.l.b16 %v84
  %v214 = vunpack.c.l.b16 %v85
  %v215 = vunpack.c.l.b16 %v86
  %v216 = vunpack.c.l.b16 %v87
  %v217 = vunpack.c.l.b16 %v88
  %v218 = vunpack.c.l.b16 %v89
  %v219 = vunpack.c.l.b16 %v90
  %v220 = vunpack.c.l.b16 %v91
  %v221 = vunpack.c.l.b16 %v92
  %v222 = vunpack.c.l.b16 %v93
  %v223 = vunpack.c.l.b16 %v94
  %v224 = vunpack.c.l.b16 %v95
  %v225 = vunpack.c.l.b16 %v96
  %v226 = vunpack.c.l.b16 %v97
  %v227 = vunpack.c.l.b16 %v98
  %v228 = vunpack.c.l.b16 %v99
  %v229 = vunpack.c.l.b16 %v100
  %v230 = vunpack.c.l.b16 %v101
  %v231 = vunpack.c.l.b16 %v102
  %v232 = vunpack.c.l.b16 %v103
  %v233 = vunpack.c.l.b16 %v104
  %v234 = vpack.c.b16 %v171, %v170
  %v235 = vpack.c.b16 %v173, %v172
  %v236 = vpack.c.b16 %v175, %v174
  %v237 = vpack.c.b16 %v177, %v176
  %v238 = vpack.c.b16 %v179, %v178
  %v239 = vpack.c.b16 %v181, %v180
  %v240 = vpack.c.b16 %v183, %v182
  %v241 = vpack.c.b16 %v185, %v184
  %v242 = vpack.c.b16 %v187, %v186
  %v243 = vpack.c.b16 %v189, %v188
  %v244 = vpack.c.b16 %v191, %v190
  %v245 = vpack.c.b16 %v193, %v192
  %v246 = vpack.c.b16 %v195, %v194
  %v247 = vpack.c.b16 %v197, %v196
  %v248 = vpack.c.b16 %v199, %v198
  %v249 = vpack.c.b16 %v201, %v200
  %v250 = vpack.c.b16 %v203, %v202
  %v251 = vpack.c.b16 %v205, %v204
  %v252 = vpack.c.b16 %v207, %v206
  %v253 = vpack.c.b16 %v209, %v208
  %v254 = vpack.c.b16 %v211, %v210
  %v255 = vpack.c.b16 %v213, %v212
  %v256 = vpack.c.b16 %v215, %v214
  %v257 = vpack.c.b16 %v217, %v216
  %v258 = vpack.c.b16 %v219, %v218
  %v259 = vpack.c.b16 %v221, %v220
  %v260 = vpack.c.b16 %v223, %v222
  %v261 = vpack.c.b16 %v225, %v224
  %v262 = vpack.c.b16 %v227, %v226
  %v263 = vpack.c.b16 %v229, %v228
  %v264 = vpack.c.b16 %v231, %v230
  %v265 = vpack.c.b16 %v233, %v232
  %298 = vmatprep.subr.bf16.mxu0 0
  %299 = vmatpush1.bf16.msra.mxu0 %v241
  %300 = vmatprep.subr.bf16.mxu0 0
  %301 = vmatpush1.bf16.msra.mxu0 %v240
  %302 = vmatprep.subr.bf16.mxu0 0
  %303 = vmatpush1.bf16.msra.mxu0 %v239
  %304 = vmatprep.subr.bf16.mxu0 0
  %305 = vmatpush1.bf16.msra.mxu0 %v238
  %306 = vmatprep.subr.bf16.mxu0 0
  %307 = vmatpush1.bf16.msra.mxu0 %v237
  %308 = vmatprep.subr.bf16.mxu0 0
  %309 = vmatpush1.bf16.msra.mxu0 %v236
  %310 = vmatprep.subr.bf16.mxu0 0
  %311 = vmatpush1.bf16.msra.mxu0 %v235
  %312 = vmatprep.subr.bf16.mxu0 0
  %313 = vmatpush1.bf16.msra.mxu0 %v234
  %314 = vmatprep.subr.bf16.mxu0 0
  %315 = vmatpush2.bf16.msra.mxu0 %v249
  %316 = vmatprep.subr.bf16.mxu0 0
  %317 = vmatpush2.bf16.msra.mxu0 %v248
  %318 = vmatprep.subr.bf16.mxu0 0
  %319 = vmatpush2.bf16.msra.mxu0 %v247
  %320 = vmatprep.subr.bf16.mxu0 0
  %321 = vmatpush2.bf16.msra.mxu0 %v246
  %322 = vmatprep.subr.bf16.mxu0 0
  %323 = vmatpush2.bf16.msra.mxu0 %v245
  %324 = vmatprep.subr.bf16.mxu0 0
  %325 = vmatpush2.bf16.msra.mxu0 %v244
  %326 = vmatprep.subr.bf16.mxu0 0
  %327 = vmatpush2.bf16.msra.mxu0 %v243
  %328 = vmatprep.subr.bf16.mxu0 0
  %329 = vmatpush2.bf16.msra.mxu0 %v242
  %330 = vmatprep.mubr.bf16.mxu0 %v38
  %331 = vmatmul.mubr.bf16.gmra.mxu0 %v37
  %v332 = vpop.f32.mrf.mxu0
  %v333 = vadd.f32 %v105, %v332
  %v334 = vpop.f32.mrf.mxu0
  %v335 = vpop.f32.mrf.mxu0
  %v336 = vpop.f32.mrf.mxu0
  %337 = vdwg.mxu0
  %338 = vmatprep.subr.bf16.mxu0 0
  %339 = vmatpush1.bf16.msra.mxu0 %v257
  %340 = vmatprep.subr.bf16.mxu0 0
  %341 = vmatpush1.bf16.msra.mxu0 %v256
  %342 = vmatprep.subr.bf16.mxu0 0
  %343 = vmatpush1.bf16.msra.mxu0 %v255
  %344 = vmatprep.subr.bf16.mxu0 0
  %345 = vmatpush1.bf16.msra.mxu0 %v254
  %346 = vmatprep.subr.bf16.mxu0 0
  %347 = vmatpush1.bf16.msra.mxu0 %v253
  %348 = vmatprep.subr.bf16.mxu0 0
  %349 = vmatpush1.bf16.msra.mxu0 %v252
  %350 = vmatprep.subr.bf16.mxu0 0
  %351 = vmatpush1.bf16.msra.mxu0 %v251
  %352 = vmatprep.subr.bf16.mxu0 0
  %353 = vmatpush1.bf16.msra.mxu0 %v250
  %354 = vmatprep.subr.bf16.mxu0 0
  %355 = vmatpush2.bf16.msra.mxu0 %v265
  %356 = vmatprep.subr.bf16.mxu0 0
  %357 = vmatpush2.bf16.msra.mxu0 %v264
  %358 = vmatprep.subr.bf16.mxu0 0
  %359 = vmatpush2.bf16.msra.mxu0 %v263
  %360 = vmatprep.subr.bf16.mxu0 0
  %361 = vmatpush2.bf16.msra.mxu0 %v262
  %362 = vmatprep.subr.bf16.mxu0 0
  %363 = vmatpush2.bf16.msra.mxu0 %v261
  %364 = vmatprep.subr.bf16.mxu0 0
  %365 = vmatpush2.bf16.msra.mxu0 %v260
  %366 = vmatprep.subr.bf16.mxu0 0
  %367 = vmatpush2.bf16.msra.mxu0 %v259
  %368 = vmatprep.subr.bf16.mxu0 0
  %369 = vmatpush2.bf16.msra.mxu0 %v258
  %370 = vmatprep.mubr.bf16.mxu0 %v40
  %371 = vmatmul.mubr.bf16.gmra.mxu0 %v39
  %v372 = vpop.f32.mrf.mxu0
  %v373 = vadd.f32 %v333, %v372
  %v374 = vpop.f32.mrf.mxu0
  %v375 = vpop.f32.mrf.mxu0
  %v376 = vpop.f32.mrf.mxu0
  %377 = vdwg.mxu0
  %v378 = vpack.c.bf16 %v373, %v373
  %vm379 = vcmask 1040384
  %vm380 = vsmask.f32 256
  %vm381 = vmand %vm379, %vm380
  %v382 = vld [vmem:[%s3] sm:$0x1]
  %v383 = vsel %vm381, %v378, %v382
  %384 = vst [vmem:[%s3] sm:$0x1] %v383
  // Predicated region
  $region14: #{_forward_logits.1} parent=0 // pred_check
    _
  $region15: #{_forward_logits.1} parent=0 // pred_check_branch
    %386 = sbr.rel (0) target = $region17
  $region16: #{_forward_logits.1} parent=0 // pred_region
    _
  $region17: #{_forward_logits.1} parent=0 // pred_fallthru
    _
  // Predicated region
  $region18: #{_forward_logits.1} parent=0 // pred_check
    _
  $region19: #{_forward_logits.1} parent=0 // pred_check_branch
    %388 = sbr.rel (0) target = $region21
  $region20: #{_forward_logits.1} parent=0 // pred_region
    _
  $region21: #{_forward_logits.1} parent=0 // pred_fallthru
    _

</llo_original>
